<compile_context>
chip_gen: v7x
topology: tpu7x:2x2x1
jax: 0.10.0
libtpu: 0.0.40
codegen_flags: <defaults>
</compile_context>

<pallas_src>
import jax
import jax.numpy as jnp
from jax.experimental import pallas as pl
from jax.experimental.pallas import tpu as pltpu

L_PAD = 128                       # hidden width (l1 = l2 = 120) zero-padded to 128 lanes
_LANE = 128
_VMEM_BUDGET = 44 * 1024 * 1024   # per-step VMEM target (fits v7x's 64 MiB physical VMEM)
_VMEM_LIMIT = 48 * 1024 * 1024    # explicit scoped-VMEM limit (v5e default is only 16 MiB)
_WEIGHT_VMEM_SLACK = 2 * 1024 * 1024


def _round_up(x, m):
    return (x + m - 1) // m * m


def mlp_penn_pi_kernel(fp_ref, pdit_ref,
                       w1f_ref, w1pt_ref, b1_ref,
                       w2_ref, b2_ref, w3_ref, b3_ref,
                       o_ref):
    """Fused 3-layer MLP on one batch tile (weights resident in VMEM)."""
    # layer_1: x @ W1 + b1 without materializing x = cat(fp, PDI, T):
    #   fp columns on the MXU (bf16 in, f32 accumulate),
    #   PDI / T columns as rank-1 broadcast multiplies on the VPU (f32).
    pdit = pdit_ref[...]                                   # (TILE_B, 2) f32
    h1 = jnp.dot(fp_ref[...].astype(jnp.bfloat16), w1f_ref[...],
                 preferred_element_type=jnp.float32)
    h1 = (h1
          + pdit[:, 0:1] * w1pt_ref[0:1, :]
          + pdit[:, 1:2] * w1pt_ref[1:2, :]
          + b1_ref[...])
    h1 = jnp.maximum(h1, 0.0)
    # TODO(synk): dropout d1 (p=0.2) is training-only; inference identity used.

    # layer_2 + ReLU (exact 128x128 MXU tile; bf16 in, f32 accumulate).
    h2 = jnp.dot(h1.astype(jnp.bfloat16), w2_ref[...],
                 preferred_element_type=jnp.float32) + b2_ref[...]
    h2 = jnp.maximum(h2, 0.0)
    # TODO(synk): dropout d2 (p=0.2) is training-only; inference identity used.

    # out layer (no activation); output kept at latent=11 lanes.
    o_ref[...] = (jnp.dot(h2.astype(jnp.bfloat16), w3_ref[...],
                          preferred_element_type=jnp.float32)
                  + b3_ref[...]).astype(o_ref.dtype)


def init_params(key, n_fp, l1=120, l2=120, latent_param_size=11):
    """PyTorch-style init: U(-1/sqrt(fan_in), 1/sqrt(fan_in)); weights stored (in, out)."""
    def linear(key, fan_in, fan_out):
        kw, kb = jax.random.split(key)
        bound = 1.0 / jnp.sqrt(jnp.float32(fan_in))
        w = jax.random.uniform(kw, (fan_in, fan_out), jnp.float32, -bound, bound)
        b = jax.random.uniform(kb, (1, fan_out), jnp.float32, -bound, bound)
        return w, b

    k1, k2, k3 = jax.random.split(key, 3)
    w1, b1 = linear(k1, n_fp + 2, l1)
    w2, b2 = linear(k2, l1, l2)
    w3, b3 = linear(k3, l2, latent_param_size)
    return (w1, b1, w2, b2, w3, b3)


def prepare_params(params):
    """Split W1 (fp rows vs PDI/T rows), zero-pad hidden dims to 128, cast MXU operands to bf16."""
    w1, b1, w2, b2, w3, b3 = params
    n_fp = w1.shape[0] - 2
    l1, l2 = w1.shape[1], w2.shape[1]
    assert l1 <= L_PAD and l2 <= L_PAD
    p1, p2 = L_PAD - l1, L_PAD - l2

    w1f = jnp.pad(w1[:n_fp], ((0, 0), (0, p1))).astype(jnp.bfloat16)   # (n_fp, 128) bf16
    w1pt = jnp.pad(w1[n_fp:], ((0, 0), (0, p1)))                       # (2, 128) f32 (PDI, T rows)
    b1p = jnp.pad(b1, ((0, 0), (0, p1)))                               # (1, 128) f32
    w2p = jnp.pad(w2, ((0, p1), (0, p2))).astype(jnp.bfloat16)         # (128, 128) bf16
    b2p = jnp.pad(b2, ((0, 0), (0, p2)))                               # (1, 128) f32
    w3p = jnp.pad(w3, ((0, p2), (0, 0))).astype(jnp.bfloat16)          # (128, latent) bf16
    return (w1f, w1pt, b1p, w2p, b2p, w3p, b3)


def mlp_penn_pi_forward(fp, PDI, T, kparams, *, pdit=None, tile_b=4096,
                        out_dtype=jnp.float32):
    """Batch-tiled fused forward. kparams from prepare_params().

    fp may be f32 or bf16 (streamed as-is, cast to bf16 on the VPU in-kernel).
    Pass a pre-merged (B, 2) `pdit` to skip the tiny PDI/T merge copy.
    """
    w1f, w1pt, b1, w2, b2, w3, b3 = kparams
    n_fp = fp.shape[1]
    latent = w3.shape[1]
    B = fp.shape[0]

    if fp.dtype not in (jnp.dtype(jnp.float32), jnp.dtype(jnp.bfloat16)):
        fp = fp.astype(jnp.float32)
    if pdit is None:
        # 2-column merge: one lane-padded VMEM stream / DMA instead of two.
        # Costs ~8 B/row extra HBM (~5% of fp bytes); upstream producers should
        # supply `pdit` pre-merged to avoid even that.
        pdit = jnp.concatenate(
            [PDI.reshape(-1, 1).astype(jnp.float32),
             T.reshape(-1, 1).astype(jnp.float32)], axis=1)
    else:
        pdit = pdit.reshape(-1, 2).astype(jnp.float32)

    fp_isz = jnp.dtype(fp.dtype).itemsize
    out_isz = jnp.dtype(out_dtype).itemsize

    # ---- batch tile selection -------------------------------------------------
    TILE_B = min(int(tile_b), _round_up(B, 8))
    TILE_B = max(8, TILE_B - TILE_B % 8)
    # Per-row VMEM of one grid step: every narrow streamed block (fp/pdit/out)
    # is lane-padded to 128 in VMEM (x2 double buffers), plus f32 h1/h2
    # temporaries and their bf16 casts.  Clamp so a step fits the v7x part.
    per_row = 2 * _LANE * (fp_isz + 4 + out_isz) + _LANE * (4 + 4 + 2 + 2)
    max_rows = max(8, ((_VMEM_BUDGET - _WEIGHT_VMEM_SLACK) // per_row) // 8 * 8)
    TILE_B = min(TILE_B, max_rows)

    steps = pl.cdiv(B, TILE_B)
    # v7x megacore: keep the step count even so the 'parallel' batch axis splits
    # evenly across the two TensorCores (negligible effect on v5e/v6e).
    if steps % 2 == 1 and B >= 512:
        even_tile = _round_up(pl.cdiv(B, steps + 1), 8)
        if even_tile >= 8:
            TILE_B = even_tile
            steps = pl.cdiv(B, TILE_B)

    grid = (steps,)   # partial last block handled by Pallas (masked writeback)

    def batch_spec(cols):
        return pl.BlockSpec((TILE_B, cols), lambda i: (i, 0))

    def const_spec(shape):
        return pl.BlockSpec(shape, lambda i: (0, 0))

    weight_bytes = (w1f.size * 2 + w1pt.size * 4 + b1.size * 4
                    + w2.size * 2 + b2.size * 4 + w3.size * 2 + b3.size * 4)
    flops = 2 * B * (n_fp * L_PAD + L_PAD * L_PAD + L_PAD * latent)
    bytes_accessed = (B * (n_fp * fp_isz + 2 * 4 + latent * out_isz)
                      + weight_bytes)

    out = pl.pallas_call(
        mlp_penn_pi_kernel,
        out_shape=jax.ShapeDtypeStruct((B, latent), out_dtype),
        grid=grid,
        in_specs=[
            batch_spec(n_fp),               # fp tile (f32 or bf16)
            batch_spec(2),                  # merged [PDI, T] tile (f32)
            const_spec((n_fp, L_PAD)),      # W1 fp-rows (bf16), resident
            const_spec((2, L_PAD)),         # W1 PDI/T rows (f32), resident
            const_spec((1, L_PAD)),         # b1
            const_spec((L_PAD, L_PAD)),     # W2 (bf16)
            const_spec((1, L_PAD)),         # b2
            const_spec((L_PAD, latent)),    # W3 (bf16)
            const_spec((1, latent)),        # b3
        ],
        out_specs=batch_spec(latent),
        compiler_params=pltpu.CompilerParams(
            dimension_semantics=("parallel",),      # megacore sharding on v7x
            vmem_limit_bytes=_VMEM_LIMIT),          # explicit: v5e default is 16 MiB
        cost_estimate=pl.CostEstimate(flops=flops, transcendentals=0,
                                      bytes_accessed=bytes_accessed),
    )(fp, pdit, w1f, w1pt, b1, w2, b2, w3, b3)

    return out


def reference_forward_fp32(fp, PDI, T, params):
    """Pure-JAX fp32 reference of the torch forward (eval mode)."""
    w1, b1, w2, b2, w3, b3 = params
    x = jnp.concatenate((fp, PDI, T), axis=1)
    x = jnp.maximum(x @ w1 + b1, 0.0)
    x = jnp.maximum(x @ w2 + b2, 0.0)
    return x @ w3 + b3


def reference_forward_matched(fp, PDI, T, kparams):
    """Pure-JAX reference with the kernel's exact numerics (bf16 MXU, f32 accumulate)."""
    w1f, w1pt, b1, w2, b2, w3, b3 = kparams
    pdit = jnp.concatenate([PDI.reshape(-1, 1), T.reshape(-1, 1)],
                           axis=1).astype(jnp.float32)
    h1 = jnp.dot(fp.astype(jnp.bfloat16), w1f, preferred_element_type=jnp.float32)
    h1 = jnp.maximum(h1 + pdit[:, 0:1] * w1pt[0:1, :]
                     + pdit[:, 1:2] * w1pt[1:2, :] + b1, 0.0)
    h2 = jnp.maximum(jnp.dot(h1.astype(jnp.bfloat16), w2,
                             preferred_element_type=jnp.float32) + b2, 0.0)
    return jnp.dot(h2.astype(jnp.bfloat16), w3,
                   preferred_element_type=jnp.float32) + b3


if __name__ == "__main__":
    n_fp = 30            # fingerprint size -> input dim = n_fp + 2 = 32
    batch = 8
    latent = 11

    key = jax.random.PRNGKey(0)
    k_fp, k_pdi, k_t, k_params = jax.random.split(key, 4)

    fp = jax.random.normal(k_fp, (batch, n_fp), jnp.float32)
    PDI = jax.random.normal(k_pdi, (batch, 1), jnp.float32)
    T = jax.random.normal(k_t, (batch, 1), jnp.float32)

    params = init_params(k_params, n_fp)
    kparams = prepare_params(params)

    # Small-batch check (single grid step).
    out = mlp_penn_pi_forward(fp, PDI, T, kparams)
    out = jax.block_until_ready(out)
    assert out.shape == (batch, latent), out.shape
    ref_m = reference_forward_matched(fp, PDI, T, kparams)
    assert jnp.allclose(out, ref_m, atol=1e-3, rtol=1e-3), "mismatch vs matched bf16 reference"
    ref32 = reference_forward_fp32(fp, PDI, T, params)
    assert jnp.allclose(out, ref32, atol=1e-1, rtol=1e-1), "mismatch vs fp32 reference"

    # Larger ragged batch exercising the multi-step grid, the partial last
    # block (masked writeback, no wrapper padding/slice) and even step counts.
    big = 2500
    kb1, kb2, kb3 = jax.random.split(jax.random.PRNGKey(1), 3)
    fp_b = jax.random.normal(kb1, (big, n_fp), jnp.float32)
    pdi_b = jax.random.normal(kb2, (big, 1), jnp.float32)
    t_b = jax.random.normal(kb3, (big, 1), jnp.float32)
    out_b = jax.block_until_ready(mlp_penn_pi_forward(fp_b, pdi_b, t_b, kparams))
    assert out_b.shape == (big, latent), out_b.shape
    ref_b = reference_forward_matched(fp_b, pdi_b, t_b, kparams)
    assert jnp.allclose(out_b, ref_b, atol=1e-3, rtol=1e-3), "mismatch (tiled ragged batch)"

    print("KERNEL_OK")
</pallas_src>

<mosaic_0001>
module attributes {stable_mosaic.version = 11 : i64} {
  func.func @mlp_penn_pi_kernel(%arg0: i32, %arg1: memref<8x30xf32, #tpu.memory_space<vmem>>, %arg2: memref<8x2xf32, #tpu.memory_space<vmem>>, %arg3: memref<30x128xbf16, #tpu.memory_space<vmem>>, %arg4: memref<2x128xf32, #tpu.memory_space<vmem>>, %arg5: memref<1x128xf32, #tpu.memory_space<vmem>>, %arg6: memref<128x128xbf16, #tpu.memory_space<vmem>>, %arg7: memref<1x128xf32, #tpu.memory_space<vmem>>, %arg8: memref<128x11xbf16, #tpu.memory_space<vmem>>, %arg9: memref<1x11xf32, #tpu.memory_space<vmem>>, %arg10: memref<8x11xf32, #tpu.memory_space<vmem>>) attributes {dimension_semantics = [#tpu.dimension_semantics<parallel>], iteration_bounds = array<i64: 1>, scalar_prefetch = 0 : i64, scratch_operands = 0 : i64, tpu.core_type = #tpu.core_type<tc>, window_params = [{transform_indices = @transform_0, window_bounds = array<i64: 8, 30>}, {transform_indices = @transform_1, window_bounds = array<i64: 8, 2>}, {pipeline_mode = #tpu.pipeline_mode<synchronous>, transform_indices = @transform_2, window_bounds = array<i64: 30, 128>}, {pipeline_mode = #tpu.pipeline_mode<synchronous>, transform_indices = @transform_3, window_bounds = array<i64: 2, 128>}, {pipeline_mode = #tpu.pipeline_mode<synchronous>, transform_indices = @transform_4, window_bounds = array<i64: 1, 128>}, {pipeline_mode = #tpu.pipeline_mode<synchronous>, transform_indices = @transform_5, window_bounds = array<i64: 128, 128>}, {pipeline_mode = #tpu.pipeline_mode<synchronous>, transform_indices = @transform_6, window_bounds = array<i64: 1, 128>}, {pipeline_mode = #tpu.pipeline_mode<synchronous>, transform_indices = @transform_7, window_bounds = array<i64: 128, 11>}, {pipeline_mode = #tpu.pipeline_mode<synchronous>, transform_indices = @transform_8, window_bounds = array<i64: 1, 11>}, {transform_indices = @transform_9, window_bounds = array<i64: 8, 11>}]} {
    %c0 = arith.constant 0 : index
    %c0_0 = arith.constant 0 : index
    %0 = vector.load %arg2[%c0, %c0_0] : memref<8x2xf32, #tpu.memory_space<vmem>>, vector<8x2xf32>
    %c0_1 = arith.constant 0 : index
    %c0_2 = arith.constant 0 : index
    %1 = vector.load %arg1[%c0_1, %c0_2] : memref<8x30xf32, #tpu.memory_space<vmem>>, vector<8x30xf32>
    %2 = arith.truncf %1 : vector<8x30xf32> to vector<8x30xbf16>
    %c0_3 = arith.constant 0 : index
    %c0_4 = arith.constant 0 : index
    %3 = vector.load %arg3[%c0_3, %c0_4] : memref<30x128xbf16, #tpu.memory_space<vmem>>, vector<30x128xbf16>
    %cst = arith.constant dense<0.000000e+00> : vector<8x128xf32>
    %4 = tpu.matmul %2, %3, %cst {dimension_numbers = #tpu.dot_dimension_numbers<[1], [0], [0], [1], [0, 0, 1, 1], [], []>} : vector<8x30xbf16>, vector<30x128xbf16>, vector<8x128xf32> -> vector<8x128xf32>
    %5 = vector.extract_strided_slice %0 {offsets = [0, 0], sizes = [8, 1], strides = [1, 1]} : vector<8x2xf32> to vector<8x1xf32>
    %c0_5 = arith.constant 0 : index
    %c0_6 = arith.constant 0 : index
    %6 = vector.load %arg4[%c0_5, %c0_6] : memref<2x128xf32, #tpu.memory_space<vmem>>, vector<1x128xf32>
    %7 = vector.broadcast %5 : vector<8x1xf32> to vector<8x128xf32>
    %8 = vector.broadcast %6 : vector<1x128xf32> to vector<8x128xf32>
    %9 = arith.mulf %7, %8 : vector<8x128xf32>
    %10 = arith.addf %4, %9 : vector<8x128xf32>
    %11 = vector.extract_strided_slice %0 {offsets = [0, 1], sizes = [8, 1], strides = [1, 1]} : vector<8x2xf32> to vector<8x1xf32>
    %c1 = arith.constant 1 : index
    %c0_7 = arith.constant 0 : index
    %12 = vector.load %arg4[%c1, %c0_7] : memref<2x128xf32, #tpu.memory_space<vmem>>, vector<1x128xf32>
    %13 = vector.broadcast %11 : vector<8x1xf32> to vector<8x128xf32>
    %14 = vector.broadcast %12 : vector<1x128xf32> to vector<8x128xf32>
    %15 = arith.mulf %13, %14 : vector<8x128xf32>
    %16 = arith.addf %10, %15 : vector<8x128xf32>
    %c0_8 = arith.constant 0 : index
    %c0_9 = arith.constant 0 : index
    %17 = vector.load %arg5[%c0_8, %c0_9] : memref<1x128xf32, #tpu.memory_space<vmem>>, vector<1x128xf32>
    %18 = vector.broadcast %17 : vector<1x128xf32> to vector<8x128xf32>
    %19 = arith.addf %16, %18 : vector<8x128xf32>
    %cst_10 = arith.constant 0.000000e+00 : f32
    %20 = vector.broadcast %cst_10 : f32 to vector<8x128xf32>
    %21 = arith.maximumf %19, %20 : vector<8x128xf32>
    %22 = arith.truncf %21 : vector<8x128xf32> to vector<8x128xbf16>
    %c0_11 = arith.constant 0 : index
    %c0_12 = arith.constant 0 : index
    %23 = vector.load %arg6[%c0_11, %c0_12] : memref<128x128xbf16, #tpu.memory_space<vmem>>, vector<128x128xbf16>
    %cst_13 = arith.constant dense<0.000000e+00> : vector<8x128xf32>
    %24 = tpu.matmul %22, %23, %cst_13 {dimension_numbers = #tpu.dot_dimension_numbers<[1], [0], [0], [1], [0, 0, 1, 1], [], []>} : vector<8x128xbf16>, vector<128x128xbf16>, vector<8x128xf32> -> vector<8x128xf32>
    %c0_14 = arith.constant 0 : index
    %c0_15 = arith.constant 0 : index
    %25 = vector.load %arg7[%c0_14, %c0_15] : memref<1x128xf32, #tpu.memory_space<vmem>>, vector<1x128xf32>
    %26 = vector.broadcast %25 : vector<1x128xf32> to vector<8x128xf32>
    %27 = arith.addf %24, %26 : vector<8x128xf32>
    %cst_16 = arith.constant 0.000000e+00 : f32
    %28 = vector.broadcast %cst_16 : f32 to vector<8x128xf32>
    %29 = arith.maximumf %27, %28 : vector<8x128xf32>
    %30 = arith.truncf %29 : vector<8x128xf32> to vector<8x128xbf16>
    %c0_17 = arith.constant 0 : index
    %c0_18 = arith.constant 0 : index
    %31 = vector.load %arg8[%c0_17, %c0_18] : memref<128x11xbf16, #tpu.memory_space<vmem>>, vector<128x11xbf16>
    %cst_19 = arith.constant dense<0.000000e+00> : vector<8x11xf32>
    %32 = tpu.matmul %30, %31, %cst_19 {dimension_numbers = #tpu.dot_dimension_numbers<[1], [0], [0], [1], [0, 0, 1, 1], [], []>} : vector<8x128xbf16>, vector<128x11xbf16>, vector<8x11xf32> -> vector<8x11xf32>
    %c0_20 = arith.constant 0 : index
    %c0_21 = arith.constant 0 : index
    %33 = vector.load %arg9[%c0_20, %c0_21] : memref<1x11xf32, #tpu.memory_space<vmem>>, vector<1x11xf32>
    %34 = vector.broadcast %33 : vector<1x11xf32> to vector<8x11xf32>
    %35 = arith.addf %32, %34 : vector<8x11xf32>
    %c0_22 = arith.constant 0 : index
    %c0_23 = arith.constant 0 : index
    %36 = vector.load %arg10[%c0_22, %c0_23] : memref<8x11xf32, #tpu.memory_space<vmem>>, vector<8x11xf32>
    tpu.vector_store %arg10[%c0_22, %c0_23], %35 {strides = array<i32>} : memref<8x11xf32, #tpu.memory_space<vmem>>, vector<8x11xf32>,
    return
  }
  func.func @transform_0(%arg0: i32) -> (i32, i32) {
    %c0_i32 = arith.constant 0 : i32
    %c0_i32_0 = arith.constant 0 : i32
    return %arg0, %c0_i32 : i32, i32
  }
  func.func @transform_1(%arg0: i32) -> (i32, i32) {
    %c0_i32 = arith.constant 0 : i32
    %c0_i32_0 = arith.constant 0 : i32
    return %arg0, %c0_i32 : i32, i32
  }
  func.func @transform_2(%arg0: i32) -> (i32, i32) {
    %c0_i32 = arith.constant 0 : i32
    %c0_i32_0 = arith.constant 0 : i32
    %c0_i32_1 = arith.constant 0 : i32
    return %c0_i32, %c0_i32_0 : i32, i32
  }
  func.func @transform_3(%arg0: i32) -> (i32, i32) {
    %c0_i32 = arith.constant 0 : i32
    %c0_i32_0 = arith.constant 0 : i32
    %c0_i32_1 = arith.constant 0 : i32
    return %c0_i32, %c0_i32_0 : i32, i32
  }
  func.func @transform_4(%arg0: i32) -> (i32, i32) {
    %c0_i32 = arith.constant 0 : i32
    %c0_i32_0 = arith.constant 0 : i32
    %c0_i32_1 = arith.constant 0 : i32
    return %c0_i32, %c0_i32_0 : i32, i32
  }
  func.func @transform_5(%arg0: i32) -> (i32, i32) {
    %c0_i32 = arith.constant 0 : i32
    %c0_i32_0 = arith.constant 0 : i32
    %c0_i32_1 = arith.constant 0 : i32
    return %c0_i32, %c0_i32_0 : i32, i32
  }
  func.func @transform_6(%arg0: i32) -> (i32, i32) {
    %c0_i32 = arith.constant 0 : i32
    %c0_i32_0 = arith.constant 0 : i32
    %c0_i32_1 = arith.constant 0 : i32
    return %c0_i32, %c0_i32_0 : i32, i32
  }
  func.func @transform_7(%arg0: i32) -> (i32, i32) {
    %c0_i32 = arith.constant 0 : i32
    %c0_i32_0 = arith.constant 0 : i32
    %c0_i32_1 = arith.constant 0 : i32
    return %c0_i32, %c0_i32_0 : i32, i32
  }
  func.func @transform_8(%arg0: i32) -> (i32, i32) {
    %c0_i32 = arith.constant 0 : i32
    %c0_i32_0 = arith.constant 0 : i32
    %c0_i32_1 = arith.constant 0 : i32
    return %c0_i32, %c0_i32_0 : i32, i32
  }
  func.func @transform_9(%arg0: i32) -> (i32, i32) {
    %c0_i32 = arith.constant 0 : i32
    %c0_i32_0 = arith.constant 0 : i32
    return %arg0, %c0_i32 : i32, i32
  }
}

</mosaic_0001>

<llo_original>
// kernel: tpu_custom_call.1
$region0: #{tpu_custom_call.1}
  #allocation0 [shape = 'u32[]', space=smem, size = 0x4, offset = 0x4, fixed_abs, tag = 'smem constant byte address 0x4 - core index']
  #allocation1 [shape = 'u32[144,128]{1,0:T(1,128)}', space=vmem, size = 0x12000, scoped, tag = 'internal scratch']
  %s0 = inlined_call_operand.vmem [shape: f32[8,30], index: 0, kind: input, shape index: {}]
  %s1 = inlined_call_operand.vmem [shape: f32[8,2], index: 1, kind: input, shape index: {}]
  %s2 = inlined_call_operand.vmem [shape: bf16[30,128], index: 2, kind: input, shape index: {}]
  %s3 = inlined_call_operand.vmem [shape: f32[2,128], index: 3, kind: input, shape index: {}]
  %s4 = inlined_call_operand.vmem [shape: f32[1,128], index: 4, kind: input, shape index: {}]
  %s5 = inlined_call_operand.vmem [shape: bf16[128,128], index: 5, kind: input, shape index: {}]
  %s6 = inlined_call_operand.vmem [shape: f32[1,128], index: 6, kind: input, shape index: {}]
  %s7 = inlined_call_operand.vmem [shape: bf16[128,11], index: 7, kind: input, shape index: {}]
  %s8 = inlined_call_operand.vmem [shape: f32[1,11], index: 8, kind: input, shape index: {}]
  %s9 = inlined_call_operand.hbm [shape: f32[8,11], index: 9, kind: output, shape index: {}]
  %s10 = sld [smem:[#allocation0]]
  $region46: #{tpu_custom_call.1} parent=0
    _
  %s12 = ssub.s32 1, %s10
  %s13 = scalar_select 0, %s12, %s10
  $region1: #{tpu_custom_call.1} parent=0
    #allocation2 [shape = 'u8[4096]{0}', space=vmem, size = 0x1000, scoped, tag = 'output window, operand 0, single buffered']
    #allocation3 [shape = 's32[1]{0}', space=sflag, size = 0x4, scoped, tag = 'scoped memory for tpu_custom_call.1']
    %14 = vsyncpa [#allocation3], 0
    // Predicated region
    $region2: #{tpu_custom_call.1} parent=1 // pred_check
      _
    $region3: #{tpu_custom_call.1} parent=1 // pred_check_branch
      %16 = sbr.rel (0) target = $region5
    $region4: #{tpu_custom_call.1} parent=1 // pred_region
      _
    $region5: #{tpu_custom_call.1} parent=1 // pred_fallthru
      _
    // Predicated region
    $region6: #{tpu_custom_call.1} parent=1 // pred_check
      _
    $region7: #{tpu_custom_call.1} parent=1 // pred_check_branch
      %18 = sbr.rel (0) target = $region9
    $region8: #{tpu_custom_call.1} parent=1 // pred_region
      _
    $region9: #{tpu_custom_call.1} parent=1 // pred_fallthru
      _
    // Predicated region
    $region10: #{tpu_custom_call.1} parent=1 // pred_check
      _
    $region11: #{tpu_custom_call.1} parent=1 // pred_check_branch
      %20 = sbr.rel (0) target = $region13
    $region12: #{tpu_custom_call.1} parent=1 // pred_region
      _
    $region13: #{tpu_custom_call.1} parent=1 // pred_fallthru
      _
    // Predicated region
    $region14: #{tpu_custom_call.1} parent=1 // pred_check
      _
    $region15: #{tpu_custom_call.1} parent=1 // pred_check_branch
      %22 = sbr.rel (0) target = $region17
    $region16: #{tpu_custom_call.1} parent=1 // pred_region
      _
    $region17: #{tpu_custom_call.1} parent=1 // pred_fallthru
      _
    // Predicated region
    $region18: #{tpu_custom_call.1} parent=1 // pred_check
      _
    $region19: #{tpu_custom_call.1} parent=1 // pred_check_branch
      %24 = sbr.rel (0) target = $region21
    $region20: #{tpu_custom_call.1} parent=1 // pred_region
      _
    $region21: #{tpu_custom_call.1} parent=1 // pred_fallthru
      _
    // Predicated region
    $region22: #{tpu_custom_call.1} parent=1 // pred_check
      _
    $region23: #{tpu_custom_call.1} parent=1 // pred_check_branch
      %26 = sbr.rel (0) target = $region25
    $region24: #{tpu_custom_call.1} parent=1 // pred_region
      _
    $region25: #{tpu_custom_call.1} parent=1 // pred_fallthru
      _
    // Predicated region
    $region26: #{tpu_custom_call.1} parent=1 // pred_check
      _
    $region27: #{tpu_custom_call.1} parent=1 // pred_check_branch
      %28 = sbr.rel (0) target = $region29
    $region28: #{tpu_custom_call.1} parent=1 // pred_region
      _
    $region29: #{tpu_custom_call.1} parent=1 // pred_fallthru
      _
    // Predicated region
    $region30: #{tpu_custom_call.1} parent=1 // pred_check
      _
    $region31: #{tpu_custom_call.1} parent=1 // pred_check_branch
      %30 = sbr.rel (0) target = $region33
    $region32: #{tpu_custom_call.1} parent=1 // pred_region
      _
    $region33: #{tpu_custom_call.1} parent=1 // pred_fallthru
      _
    // Predicated region
    $region34: #{tpu_custom_call.1} parent=1 // pred_check
      _
    $region35: #{tpu_custom_call.1} parent=1 // pred_check_branch
      %32 = sbr.rel (0) target = $region37
    $region36: #{tpu_custom_call.1} parent=1 // pred_region
      _
    $region37: #{tpu_custom_call.1} parent=1 // pred_fallthru
      _
    %v34 = vld [vmem:[%s1] sm:$0xff]
    %v35 = vld [vmem:[%s0] sm:$0xff]
    %v36 = vpack.c.bf16 %v35, %v35
    %v37 = vld [vmem:[%s2] sm:$0xf]
    %v38 = vld [vmem:[%s2 + $0x4] sm:$0xf]
    %v39 = vld [vmem:[%s2 + $0x8] sm:$0xf]
    %v40 = vld [vmem:[%s2 + $0xc] sm:$0x7]
    %v41 = vld [vmem:[%s3] sm:$0x1]
    %43 = vset.pattern.permute.xlu0 0
    %44 = vperm.xlu0 %43, %v34
    %v45 = vpop.permute.xlu0 %44
    %v47 = vlaneseq
    %v48 = vshrl.u32 %v47, 7
    %v49 = vsub.s32 0, %v48
    %v50 = vrot.slane %v41, %v49
    %v51 = vmul.f32 %v45, %v50
    %v56 = vunpack.c.l.b16 %v37
    %v57 = vunpack.c.l.b16 %v38
    %v58 = vunpack.c.l.b16 %v39
    %v59 = vunpack.c.l.b16 %v40
    %v60 = vpack.c.b16 %v57, %v56
    %v61 = vpack.c.b16 %v59, %v58
    %vm63 = vcmask 244736
    %v65 = vsel %vm63, %v36, 0
    %vm67 = vcmask 1046528
    %v69 = vsel %vm67, %v61, 0
    %71 = vmatprep.subr.bf16.mxu0 0
    %72 = vmatpush1.bf16.msra.mxu0 %v60
    %73 = vmatprep.subr.bf16.mxu0 0
    %74 = vmatpush1.bf16.msra.mxu0 %v69
    %75 = vmatprep.subr.bf16.mxu0 0
    %76 = vmatpush1.bf16.msra.mxu0 0
    %77 = vmatprep.subr.bf16.mxu0 0
    %78 = vmatpush1.bf16.msra.mxu0 0
    %79 = vmatprep.subr.bf16.mxu0 0
    %80 = vmatpush1.bf16.msra.mxu0 0
    %81 = vmatprep.subr.bf16.mxu0 0
    %82 = vmatpush1.bf16.msra.mxu0 0
    %83 = vmatprep.subr.bf16.mxu0 0
    %84 = vmatpush1.bf16.msra.mxu0 0
    %85 = vmatprep.subr.bf16.mxu0 0
    %86 = vmatpush1.bf16.msra.mxu0 0
    %87 = vmatprep.subr.bf16.mxu0 0
    %88 = vmatpush1.bf16.msra.mxu0 0
    %89 = vmatprep.subr.bf16.mxu0 0
    %90 = vmatpush1.bf16.msra.mxu0 0
    %91 = vmatprep.subr.bf16.mxu0 0
    %92 = vmatpush1.bf16.msra.mxu0 0
    %93 = vmatprep.subr.bf16.mxu0 0
    %94 = vmatpush1.bf16.msra.mxu0 0
    %95 = vmatprep.subr.bf16.mxu0 0
    %96 = vmatpush1.bf16.msra.mxu0 0
    %97 = vmatprep.subr.bf16.mxu0 0
    %98 = vmatpush1.bf16.msra.mxu0 0
    %99 = vmatprep.subr.bf16.mxu0 0
    %100 = vmatpush1.bf16.msra.mxu0 0
    %101 = vmatprep.subr.bf16.mxu0 0
    %102 = vmatpush1.bf16.msra.mxu0 0
    %103 = vmatprep.mubr.bf16.mxu0 0
    %104 = vmatmul.mubr.bf16.gmra.mrb[0].mxu0 %v65
    %v105 = vpop.f32.mrb[0].mxu0
    %v106 = vadd.f32 %v51, %v105
    %v107 = vpop.f32.mrb[0].mxu0
    %v108 = vpop.f32.mrb[0].mxu0
    %v109 = vpop.f32.mrb[0].mxu0
    %110 = vdwg.mxu0
    %v111 = vld [vmem:[%s3 + $0x1] sm:$0x1]
    %112 = vset.pattern.permute.xlu0 1
    %113 = vperm.xlu0 %112, %v34
    %v114 = vpop.permute.xlu0 %113
    %v116 = vlaneseq
    %v117 = vshrl.u32 %v116, 7
    %v118 = vsub.s32 0, %v117
    %v119 = vrot.slane %v111, %v118
    %v120 = vmul.f32 %v114, %v119
    %v121 = vadd.f32 %v106, %v120
    %v122 = vld [vmem:[%s4] sm:$0x1]
    %v124 = vlaneseq
    %v125 = vshrl.u32 %v124, 7
    %v126 = vsub.s32 0, %v125
    %v127 = vrot.slane %v122, %v126
    %v129 = vadd.f32 %v121, %v127
    %v130 = vmax.f32 %v129, 0.0
    %v131 = vpack.c.bf16 %v130, %v130
    %v132 = vld [vmem:[%s5] sm:$0xf]
    %v133 = vld [vmem:[%s5 + $0x4] sm:$0xf]
    %v134 = vld [vmem:[%s5 + $0x8] sm:$0xf]
    %v135 = vld [vmem:[%s5 + $0xc] sm:$0xf]
    %v136 = vld [vmem:[%s5 + $0x10] sm:$0xf]
    %v137 = vld [vmem:[%s5 + $0x14] sm:$0xf]
    %v138 = vld [vmem:[%s5 + $0x18] sm:$0xf]
    %v139 = vld [vmem:[%s5 + $0x1c] sm:$0xf]
    %v140 = vld [vmem:[%s5 + $0x20] sm:$0xf]
    %v141 = vld [vmem:[%s5 + $0x24] sm:$0xf]
    %v142 = vld [vmem:[%s5 + $0x28] sm:$0xf]
    %v143 = vld [vmem:[%s5 + $0x2c] sm:$0xf]
    %v144 = vld [vmem:[%s5 + $0x30] sm:$0xf]
    %v145 = vld [vmem:[%s5 + $0x34] sm:$0xf]
    %v146 = vld [vmem:[%s5 + $0x38] sm:$0xf]
    %v147 = vld [vmem:[%s5 + $0x3c] sm:$0xf]
    %v148 = vld [vmem:[%s6] sm:$0x1]
    %v150 = vlaneseq
    %v151 = vshrl.u32 %v150, 7
    %v152 = vsub.s32 0, %v151
    %v153 = vrot.slane %v148, %v152
    %v171 = vunpack.c.l.b16 %v132
    %v172 = vunpack.c.l.b16 %v133
    %v173 = vunpack.c.l.b16 %v134
    %v174 = vunpack.c.l.b16 %v135
    %v175 = vunpack.c.l.b16 %v136
    %v176 = vunpack.c.l.b16 %v137
    %v177 = vunpack.c.l.b16 %v138
    %v178 = vunpack.c.l.b16 %v139
    %v179 = vunpack.c.l.b16 %v140
    %v180 = vunpack.c.l.b16 %v141
    %v181 = vunpack.c.l.b16 %v142
    %v182 = vunpack.c.l.b16 %v143
    %v183 = vunpack.c.l.b16 %v144
    %v184 = vunpack.c.l.b16 %v145
    %v185 = vunpack.c.l.b16 %v146
    %v186 = vunpack.c.l.b16 %v147
    %v187 = vpack.c.b16 %v172, %v171
    %v188 = vpack.c.b16 %v174, %v173
    %v189 = vpack.c.b16 %v176, %v175
    %v190 = vpack.c.b16 %v178, %v177
    %v191 = vpack.c.b16 %v180, %v179
    %v192 = vpack.c.b16 %v182, %v181
    %v193 = vpack.c.b16 %v184, %v183
    %v194 = vpack.c.b16 %v186, %v185
    %203 = vmatprep.subr.bf16.mxu0 0
    %204 = vmatpush1.bf16.msra.mxu0 %v187
    %205 = vmatprep.subr.bf16.mxu0 0
    %206 = vmatpush1.bf16.msra.mxu0 %v188
    %207 = vmatprep.subr.bf16.mxu0 0
    %208 = vmatpush1.bf16.msra.mxu0 %v189
    %209 = vmatprep.subr.bf16.mxu0 0
    %210 = vmatpush1.bf16.msra.mxu0 %v190
    %211 = vmatprep.subr.bf16.mxu0 0
    %212 = vmatpush1.bf16.msra.mxu0 %v191
    %213 = vmatprep.subr.bf16.mxu0 0
    %214 = vmatpush1.bf16.msra.mxu0 %v192
    %215 = vmatprep.subr.bf16.mxu0 0
    %216 = vmatpush1.bf16.msra.mxu0 %v193
    %217 = vmatprep.subr.bf16.mxu0 0
    %218 = vmatpush1.bf16.msra.mxu0 %v194
    %219 = vmatprep.subr.bf16.mxu0 0
    %220 = vmatpush1.bf16.msra.mxu0 0
    %221 = vmatprep.subr.bf16.mxu0 0
    %222 = vmatpush1.bf16.msra.mxu0 0
    %223 = vmatprep.subr.bf16.mxu0 0
    %224 = vmatpush1.bf16.msra.mxu0 0
    %225 = vmatprep.subr.bf16.mxu0 0
    %226 = vmatpush1.bf16.msra.mxu0 0
    %227 = vmatprep.subr.bf16.mxu0 0
    %228 = vmatpush1.bf16.msra.mxu0 0
    %229 = vmatprep.subr.bf16.mxu0 0
    %230 = vmatpush1.bf16.msra.mxu0 0
    %231 = vmatprep.subr.bf16.mxu0 0
    %232 = vmatpush1.bf16.msra.mxu0 0
    %233 = vmatprep.subr.bf16.mxu0 0
    %234 = vmatpush1.bf16.msra.mxu0 0
    %235 = vmatprep.mubr.bf16.mxu0 0
    %236 = vmatmul.mubr.bf16.gmra.mrb[0].mxu0 %v131
    %v237 = vpop.f32.mrb[0].mxu0
    %v238 = vadd.f32 %v153, %v237
    %v239 = vpop.f32.mrb[0].mxu0
    %v240 = vpop.f32.mrb[0].mxu0
    %v241 = vpop.f32.mrb[0].mxu0
    %242 = vdwg.mxu0
    %v243 = vmax.f32 %v238, 0.0
    %v244 = vpack.c.bf16 %v243, %v243
    %v245 = vld [vmem:[%s7] sm:$0xf]
    %v246 = vld [vmem:[%s7 + $0x4] sm:$0xf]
    %v247 = vld [vmem:[%s7 + $0x8] sm:$0xf]
    %v248 = vld [vmem:[%s7 + $0xc] sm:$0xf]
    %v249 = vld [vmem:[%s7 + $0x10] sm:$0xf]
    %v250 = vld [vmem:[%s7 + $0x14] sm:$0xf]
    %v251 = vld [vmem:[%s7 + $0x18] sm:$0xf]
    %v252 = vld [vmem:[%s7 + $0x1c] sm:$0xf]
    %v253 = vld [vmem:[%s7 + $0x20] sm:$0xf]
    %v254 = vld [vmem:[%s7 + $0x24] sm:$0xf]
    %v255 = vld [vmem:[%s7 + $0x28] sm:$0xf]
    %v256 = vld [vmem:[%s7 + $0x2c] sm:$0xf]
    %v257 = vld [vmem:[%s7 + $0x30] sm:$0xf]
    %v258 = vld [vmem:[%s7 + $0x34] sm:$0xf]
    %v259 = vld [vmem:[%s7 + $0x38] sm:$0xf]
    %v260 = vld [vmem:[%s7 + $0x3c] sm:$0xf]
    %v261 = vld [vmem:[%s8] sm:$0x1]
    %v263 = vlaneseq
    %v264 = vshrl.u32 %v263, 7
    %v265 = vsub.s32 0, %v264
    %v266 = vrot.slane %v261, %v265
    %v284 = vunpack.c.l.b16 %v245
    %v285 = vunpack.c.l.b16 %v246
    %v286 = vunpack.c.l.b16 %v247
    %v287 = vunpack.c.l.b16 %v248
    %v288 = vunpack.c.l.b16 %v249
    %v289 = vunpack.c.l.b16 %v250
    %v290 = vunpack.c.l.b16 %v251
    %v291 = vunpack.c.l.b16 %v252
    %v292 = vunpack.c.l.b16 %v253
    %v293 = vunpack.c.l.b16 %v254
    %v294 = vunpack.c.l.b16 %v255
    %v295 = vunpack.c.l.b16 %v256
    %v296 = vunpack.c.l.b16 %v257
    %v297 = vunpack.c.l.b16 %v258
    %v298 = vunpack.c.l.b16 %v259
    %v299 = vunpack.c.l.b16 %v260
    %v300 = vpack.c.b16 %v285, %v284
    %v301 = vpack.c.b16 %v287, %v286
    %v302 = vpack.c.b16 %v289, %v288
    %v303 = vpack.c.b16 %v291, %v290
    %v304 = vpack.c.b16 %v293, %v292
    %v305 = vpack.c.b16 %v295, %v294
    %v306 = vpack.c.b16 %v297, %v296
    %v307 = vpack.c.b16 %v299, %v298
    %316 = vmatprep.subr.bf16.mxu0 0
    %317 = vmatpush1.bf16.msra.mxu0 %v300
    %318 = vmatprep.subr.bf16.mxu0 0
    %319 = vmatpush1.bf16.msra.mxu0 %v301
    %320 = vmatprep.subr.bf16.mxu0 0
    %321 = vmatpush1.bf16.msra.mxu0 %v302
    %322 = vmatprep.subr.bf16.mxu0 0
    %323 = vmatpush1.bf16.msra.mxu0 %v303
    %324 = vmatprep.subr.bf16.mxu0 0
    %325 = vmatpush1.bf16.msra.mxu0 %v304
    %326 = vmatprep.subr.bf16.mxu0 0
    %327 = vmatpush1.bf16.msra.mxu0 %v305
    %328 = vmatprep.subr.bf16.mxu0 0
    %329 = vmatpush1.bf16.msra.mxu0 %v306
    %330 = vmatprep.subr.bf16.mxu0 0
    %331 = vmatpush1.bf16.msra.mxu0 %v307
    %332 = vmatprep.subr.bf16.mxu0 0
    %333 = vmatpush1.bf16.msra.mxu0 0
    %334 = vmatprep.subr.bf16.mxu0 0
    %335 = vmatpush1.bf16.msra.mxu0 0
    %336 = vmatprep.subr.bf16.mxu0 0
    %337 = vmatpush1.bf16.msra.mxu0 0
    %338 = vmatprep.subr.bf16.mxu0 0
    %339 = vmatpush1.bf16.msra.mxu0 0
    %340 = vmatprep.subr.bf16.mxu0 0
    %341 = vmatpush1.bf16.msra.mxu0 0
    %342 = vmatprep.subr.bf16.mxu0 0
    %343 = vmatpush1.bf16.msra.mxu0 0
    %344 = vmatprep.subr.bf16.mxu0 0
    %345 = vmatpush1.bf16.msra.mxu0 0
    %346 = vmatprep.subr.bf16.mxu0 0
    %347 = vmatpush1.bf16.msra.mxu0 0
    %348 = vmatprep.mubr.bf16.mxu0 0
    %349 = vmatmul.mubr.bf16.gmra.mrb[0].mxu0 %v244
    %v350 = vpop.f32.mrb[0].mxu0
    %v351 = vadd.f32 %v266, %v350
    %v352 = vpop.f32.mrb[0].mxu0
    %v353 = vpop.f32.mrb[0].mxu0
    %v354 = vpop.f32.mrb[0].mxu0
    %355 = vdwg.mxu0
    %vm356 = vcmask 89088
    %357 = vst.msk [vmem:[#allocation2] sm:$0xff] %vm356, %v351
    // Predicated region
    $region38: #{tpu_custom_call.1} parent=1 // pred_check
      _
    $region39: #{tpu_custom_call.1} parent=1 // pred_check_branch
      %359 = sbr.rel (0) target = $region41
    $region40: #{tpu_custom_call.1} parent=1 // pred_region
      %s361 = ssub.s32 128, 128
      %362 = vsyncadd [#allocation3], %s361
      %s364 = sshll.u32 [#allocation2], 4
      %s365 = int_to_ptr.vmem [resolvable:$true] %s364
      %367 = dma.vmem_to_hbm [thread:$0]  %s365, 128, %s9, [#allocation3]
    $region41: #{tpu_custom_call.1} parent=1 // pred_fallthru
      _
    // Predicated region
    $region42: #{tpu_custom_call.1} parent=1 // pred_check
      _
    $region43: #{tpu_custom_call.1} parent=1 // pred_check_branch
      %369 = sbr.rel (0) target = $region45
    $region44: #{tpu_custom_call.1} parent=1 // pred_region
      %370 = dma.done [#allocation3], 128
    $region45: #{tpu_custom_call.1} parent=1 // pred_fallthru
      _
    %371 = vsyncpa [#allocation3], 1

</llo_original>
